<compile_context>
chip_gen: v7x
topology: tpu7x:2x2x1
jax: 0.10.0
libtpu: 0.0.40
codegen_flags: <defaults>
</compile_context>

<pallas_src>
import jax
import jax.numpy as jnp
from jax.experimental import pallas as pl
from jax.experimental.pallas import tpu as pltpu


def _round_up(x, m):
    return ((x + m - 1) // m) * m


def _temp_scaled_classifier_kernel(t_ref, x_ref, w_ref, b_ref, o_ref, acc_ref):
    # t_ref:   SMEM (1,)       f32 temperature (scalar prefetch)
    # x_ref:   VMEM (tm, tk)   f32 flattened-input tile
    # w_ref:   VMEM (tk, tn)   bf16 classifier-weight tile (streamed)
    # b_ref:   VMEM (1,  tn)   f32 bias tile
    # o_ref:   VMEM (tm, tn)   f32 temperature-scaled logits tile
    # acc_ref: VMEM (tm, tn)   f32 accumulator scratch (resident across K)
    k = pl.program_id(2)

    @pl.when(k == 0)
    def _zero():
        acc_ref[...] = jnp.zeros_like(acc_ref)

    acc_ref[...] += jnp.dot(
        x_ref[...],
        w_ref[...].astype(jnp.float32),
        preferred_element_type=jnp.float32,
    )

    @pl.when(k == pl.num_programs(2) - 1)
    def _finalize():
        inv_t = 1.0 / t_ref[0]
        o_ref[...] = ((acc_ref[...] + b_ref[...]) * inv_t).astype(o_ref.dtype)


def model_with_temperature_forward(x_nchw, weight, bias, temperature,
                                   *, tm=128, tn=128, tk=512):
    """x_nchw: [B, C, H, W] f32; weight: [D, N] f32; bias: [N] f32; temperature: [1] f32."""
    B = x_nchw.shape[0]
    D, N = weight.shape

    # Glue: flatten like torch .view(B, -1) (row-major over C, H, W).
    x_flat = x_nchw.reshape(B, -1).astype(jnp.float32)
    assert x_flat.shape[1] == D, "flattened feature dim must match weight rows"

    # Pad to tile-aligned shapes (zero padding is exact for matmul / bias).
    tk = min(tk, _round_up(D, 128))
    Mp = _round_up(B, tm)
    Np = _round_up(N, tn)
    Dp = _round_up(D, tk)

    x_p = jnp.zeros((Mp, Dp), jnp.float32).at[:B, :D].set(x_flat)
    # Stream weight in bf16 (cast once here, outside the kernel); zero-pad D/N.
    w_p = (jnp.zeros((Dp, Np), jnp.float32).at[:D, :N].set(weight)
           .astype(jnp.bfloat16))
    b_p = jnp.zeros((1, Np), jnp.float32).at[0, :N].set(bias)
    t = temperature.reshape((1,)).astype(jnp.float32)

    grid = (Mp // tm, Np // tn, Dp // tk)

    out_p = pl.pallas_call(
        _temp_scaled_classifier_kernel,
        out_shape=jax.ShapeDtypeStruct((Mp, Np), jnp.float32),
        grid_spec=pltpu.PrefetchScalarGridSpec(
            num_scalar_prefetch=1,               # temperature -> SMEM
            grid=grid,
            in_specs=[
                pl.BlockSpec((tm, tk), lambda i, j, k, t_s: (i, k)),  # x
                pl.BlockSpec((tk, tn), lambda i, j, k, t_s: (k, j)),  # W (bf16)
                pl.BlockSpec((1, tn), lambda i, j, k, t_s: (0, j)),   # bias
            ],
            out_specs=pl.BlockSpec((tm, tn), lambda i, j, k, t_s: (i, j)),
            scratch_shapes=[pltpu.VMEM((tm, tn), jnp.float32)],
        ),
        compiler_params=pltpu.CompilerParams(
            dimension_semantics=("parallel", "parallel", "arbitrary"),
        ),
        cost_estimate=pl.CostEstimate(
            flops=2 * Mp * Dp * Np,
            transcendentals=0,
            bytes_accessed=Mp * Dp * 4 + Dp * Np * 2 + Np * 4 + Mp * Np * 4,
        ),
    )(t, x_p, w_p, b_p)

    # Slice away the batch / class padding.
    return out_p[:B, :N]


if __name__ == "__main__":
    # Small shapes consistent with an image classifier: batch=2, channels=4, spatial=16.
    B, C, H, W = 2, 4, 16, 16
    D = C * H * W            # 1024 flattened features
    NUM_CLASSES = 128        # lane-aligned class count

    key = jax.random.PRNGKey(0)
    kx, kw, kb = jax.random.split(key, 3)

    x = jax.random.normal(kx, (B, C, H, W), dtype=jnp.float32)
    # Deterministic "frozen" wrapped-model parameters (requires_grad=False in torch).
    weight = jax.random.normal(kw, (D, NUM_CLASSES), dtype=jnp.float32) * 0.02
    bias = jax.random.normal(kb, (NUM_CLASSES,), dtype=jnp.float32) * 0.01
    # nn.Parameter(th.ones(1)) -> temperature initialized to 1.0
    temperature = jnp.ones((1,), dtype=jnp.float32)

    out = model_with_temperature_forward(x, weight, bias, temperature)
    out = jax.block_until_ready(out)

    # Reference in plain JAX, using the same bf16-rounded weight the kernel streams.
    w_ref = weight.astype(jnp.bfloat16).astype(jnp.float32)
    ref = (x.reshape(B, D) @ w_ref + bias) / temperature[0]
    assert out.shape == (B, NUM_CLASSES)
    assert jnp.allclose(out, ref, atol=1e-3, rtol=1e-3)

    # TODO(synk): calibrate() (LBFGS temperature fit + ECE metric) is a host-side
    # optimization loop, not part of forward(); not implemented as a kernel.

    print("KERNEL_OK")
</pallas_src>

<mosaic_0001>
module attributes {stable_mosaic.version = 11 : i64} {
  func.func @_temp_scaled_classifier_kernel(%arg0: i32, %arg1: i32, %arg2: i32, %arg3: memref<1xf32, #tpu.memory_space<smem>>, %arg4: memref<128x512xf32, #tpu.memory_space<vmem>>, %arg5: memref<512x128xbf16, #tpu.memory_space<vmem>>, %arg6: memref<1x128xf32, #tpu.memory_space<vmem>>, %arg7: memref<128x128xf32, #tpu.memory_space<vmem>>, %arg8: memref<128x128xf32, #tpu.memory_space<vmem>>) attributes {dimension_semantics = [#tpu.dimension_semantics<parallel>, #tpu.dimension_semantics<parallel>, #tpu.dimension_semantics<arbitrary>], iteration_bounds = array<i64: 1, 1, 2>, scalar_prefetch = 1 : i64, scratch_operands = 1 : i64, tpu.core_type = #tpu.core_type<tc>, window_params = [{transform_indices = @transform_0, window_bounds = array<i64: 128, 512>}, {transform_indices = @transform_1, window_bounds = array<i64: 512, 128>}, {transform_indices = @transform_2, window_bounds = array<i64: 1, 128>}, {transform_indices = @transform_3, window_bounds = array<i64: 128, 128>}]} {
    %c0_i32 = arith.constant 0 : i32
    %0 = arith.cmpi eq, %arg2, %c0_i32 : i32
    %1 = arith.extui %0 : i1 to i32
    %c0_i32_0 = arith.constant 0 : i32
    %2 = arith.cmpi ne, %1, %c0_i32_0 : i32
    scf.if %2 {
      %cst_9 = arith.constant 0.000000e+00 : f32
      %13 = vector.broadcast %cst_9 : f32 to vector<128x128xf32>
      %c0_10 = arith.constant 0 : index
      %c0_11 = arith.constant 0 : index
      %14 = vector.load %arg8[%c0_10, %c0_11] : memref<128x128xf32, #tpu.memory_space<vmem>>, vector<128x128xf32>
      tpu.vector_store %arg8[%c0_10, %c0_11], %13 {strides = array<i32>} : memref<128x128xf32, #tpu.memory_space<vmem>>, vector<128x128xf32>,
    } else {
    }
    %c0 = arith.constant 0 : index
    %c0_1 = arith.constant 0 : index
    %3 = vector.load %arg8[%c0, %c0_1] : memref<128x128xf32, #tpu.memory_space<vmem>>, vector<128x128xf32>
    %c0_2 = arith.constant 0 : index
    %c0_3 = arith.constant 0 : index
    %4 = vector.load %arg4[%c0_2, %c0_3] : memref<128x512xf32, #tpu.memory_space<vmem>>, vector<128x512xf32>
    %c0_4 = arith.constant 0 : index
    %c0_5 = arith.constant 0 : index
    %5 = vector.load %arg5[%c0_4, %c0_5] : memref<512x128xbf16, #tpu.memory_space<vmem>>, vector<512x128xbf16>
    %6 = arith.extf %5 : vector<512x128xbf16> to vector<512x128xf32>
    %cst = arith.constant dense<0.000000e+00> : vector<128x128xf32>
    %7 = tpu.matmul %4, %6, %cst {dimension_numbers = #tpu.dot_dimension_numbers<[1], [0], [0], [1], [0, 0, 1, 1], [], []>} : vector<128x512xf32>, vector<512x128xf32>, vector<128x128xf32> -> vector<128x128xf32>
    %8 = arith.addf %3, %7 : vector<128x128xf32>
    %c0_6 = arith.constant 0 : index
    %c0_7 = arith.constant 0 : index
    %9 = vector.load %arg8[%c0_6, %c0_7] : memref<128x128xf32, #tpu.memory_space<vmem>>, vector<128x128xf32>
    tpu.vector_store %arg8[%c0_6, %c0_7], %8 {strides = array<i32>} : memref<128x128xf32, #tpu.memory_space<vmem>>, vector<128x128xf32>,
    %c1_i32 = arith.constant 1 : i32
    %10 = arith.cmpi eq, %arg2, %c1_i32 : i32
    %11 = arith.extui %10 : i1 to i32
    %c0_i32_8 = arith.constant 0 : i32
    %12 = arith.cmpi ne, %11, %c0_i32_8 : i32
    scf.if %12 {
      %c0_9 = arith.constant 0 : index
      %13 = memref.load %arg3[%c0_9] : memref<1xf32, #tpu.memory_space<smem>>
      %cst_10 = arith.constant 1.000000e+00 : f32
      %14 = arith.divf %cst_10, %13 : f32
      %c0_11 = arith.constant 0 : index
      %c0_12 = arith.constant 0 : index
      %15 = vector.load %arg8[%c0_11, %c0_12] : memref<128x128xf32, #tpu.memory_space<vmem>>, vector<128x128xf32>
      %c0_13 = arith.constant 0 : index
      %c0_14 = arith.constant 0 : index
      %16 = vector.load %arg6[%c0_13, %c0_14] : memref<1x128xf32, #tpu.memory_space<vmem>>, vector<1x128xf32>
      %17 = vector.broadcast %16 : vector<1x128xf32> to vector<128x128xf32>
      %18 = arith.addf %15, %17 : vector<128x128xf32>
      %19 = vector.broadcast %14 : f32 to vector<128x128xf32>
      %20 = arith.mulf %18, %19 : vector<128x128xf32>
      %c0_15 = arith.constant 0 : index
      %c0_16 = arith.constant 0 : index
      %21 = vector.load %arg7[%c0_15, %c0_16] : memref<128x128xf32, #tpu.memory_space<vmem>>, vector<128x128xf32>
      tpu.vector_store %arg7[%c0_15, %c0_16], %20 {strides = array<i32>} : memref<128x128xf32, #tpu.memory_space<vmem>>, vector<128x128xf32>,
    } else {
    }
    return
  }
  func.func @transform_0(%arg0: i32, %arg1: i32, %arg2: i32, %arg3: memref<1xf32, #tpu.memory_space<smem>>) -> (i32, i32) {
    %c0_i32 = arith.constant 0 : i32
    return %arg0, %arg2 : i32, i32
  }
  func.func @transform_1(%arg0: i32, %arg1: i32, %arg2: i32, %arg3: memref<1xf32, #tpu.memory_space<smem>>) -> (i32, i32) {
    %c0_i32 = arith.constant 0 : i32
    return %arg2, %arg1 : i32, i32
  }
  func.func @transform_2(%arg0: i32, %arg1: i32, %arg2: i32, %arg3: memref<1xf32, #tpu.memory_space<smem>>) -> (i32, i32) {
    %c0_i32 = arith.constant 0 : i32
    %c0_i32_0 = arith.constant 0 : i32
    return %c0_i32, %arg1 : i32, i32
  }
  func.func @transform_3(%arg0: i32, %arg1: i32, %arg2: i32, %arg3: memref<1xf32, #tpu.memory_space<smem>>) -> (i32, i32) {
    %c0_i32 = arith.constant 0 : i32
    return %arg0, %arg1 : i32, i32
  }
}

</mosaic_0001>

<llo_original>
// kernel: tpu_custom_call.1
$region0: #{tpu_custom_call.1}
  #allocation0 [shape = 'u32[]', space=smem, size = 0x4, offset = 0x4, fixed_abs, tag = 'smem constant byte address 0x4 - core index']
  #allocation1 [shape = 'u32[144,128]{1,0:T(1,128)}', space=vmem, size = 0x12000, scoped, tag = 'internal scratch']
  #allocation2 [shape = 'f32[128,128]{1,0:T(8,128)}', space=vmem, size = 0x10000, scoped, tag = 'scratch operand']
  #allocation3 [shape = 's32[1]{0}', space=sflag, size = 0x4, scoped, tag = 'scoped memory for tpu_custom_call.1']
  #allocation4 [shape = 'f32[1]{0:T(128)S(6)}', space=smem, size = 0x200, scoped, tag = 'prefetched SMEM operand 0']
  %s0 = inlined_call_operand.<no memory space> [shape: f32[1], index: 0, kind: input, shape index: {}]
  %s1 = inlined_call_operand.hbm [shape: f32[128,1024], index: 1, kind: input, shape index: {}]
  %s2 = inlined_call_operand.hbm [shape: bf16[1024,128], index: 2, kind: input, shape index: {}]
  %s3 = inlined_call_operand.vmem [shape: f32[1,128], index: 3, kind: input, shape index: {}]
  %s4 = inlined_call_operand.hbm [shape: f32[128,128], index: 4, kind: output, shape index: {}]
  %s5 = sld [smem:[#allocation0]]
  $region61: #{tpu_custom_call.1} parent=0
    _
  %s7 = ssub.s32 1, %s5
  %s8 = scalar_select 0, %s7, %s5
  %9 = sst [smem:[#allocation4]] %s0
  $region1: #{tpu_custom_call.1} parent=0
    #allocation5 [shape = 'u8[524288]{0}', space=vmem, size = 0x80000, scoped, tag = 'input window, operand 1']
    #allocation6 [shape = 's32[2]{0}', space=sflag, size = 0x8, scoped, tag = 'scoped memory for tpu_custom_call.1']
    #allocation7 [shape = 's32[2]{0}', space=sflag, size = 0x8, scoped, tag = 'scoped memory for tpu_custom_call.1']
    #allocation8 [shape = 'u8[262144]{0}', space=vmem, size = 0x40000, scoped, tag = 'input window, operand 2']
    #allocation9 [shape = 's32[2]{0}', space=sflag, size = 0x8, scoped, tag = 'scoped memory for tpu_custom_call.1']
    #allocation10 [shape = 'u8[65536]{0}', space=vmem, size = 0x10000, scoped, tag = 'output window, operand 0, single buffered']
    %10 = vsyncpa [#allocation6], 0
    %s11 = scalar_lea.sflag [#allocation6], 1
    %12 = vsyncpa %s11, 0
    %13 = vsyncpa [#allocation9], 0
    %s14 = scalar_lea.sflag [#allocation9], 1
    %15 = vsyncpa %s14, 0
    %16 = vsyncpa [#allocation7], 0
    loop: start=0, step=1, limit=4
    $region2: #{tpu_custom_call.1} parent=1 // loop_pre_header
      _
    $region3: #{tpu_custom_call.1} parent=1 // loop_header
      %s18 = sphi 0, %s22
      %p19 = scmp.ge.s32.totalorder %s18, 4
      %s25 = sphi 0, %s44
      %s26 = sphi 0, %s40
      %s27 = sphi 0, %s36
      %s28 = sphi 0, %s25
      %s29 = sphi 0, %s26
      %s30 = sphi 0, %s27
      %s31 = sphi 0, %s28
      %s32 = sphi 0, %s29
      %s33 = sphi 0, %s30
      %s49 = sphi 0, %s51
      %s52 = sphi 0, %s49
      %s53 = sphi 0, %s52
      %s69 = sphi 0, %s53
      %s77 = sphi 0, %s79
      %s80 = sphi 0, %s77
      %s81 = sphi 0, %s80
      %s97 = sphi 0, %s81
      %s103 = sphi 0, %s105
      %s106 = sphi 0, %s103
      %s107 = sphi 0, %s106
      %s123 = sphi 0, %s107
      %s131 = sphi 0, %s133
      %s134 = sphi 0, %s131
      %s135 = sphi 0, %s134
      %s151 = sphi 0, %s135
    $region4: #{tpu_custom_call.1} parent=1 // loop_header_branch
      %21 = sbr.rel (%p19) target = $region8
    $region5: #{tpu_custom_call.1} parent=1 // loop_body
      %s23 = ssub.s32 %s18, 1
      %s24 = ssub.s32 %s18, 2
      %s34 = sadd.s32 1, %s27
      %p35 = scmp.ge.s32.totalorder %s34, 2
      %s36 = scalar_select %p35, 0, %s34
      %s37 = sadd.s32 1, %s26
      %s38 = scalar_select %p35, %s37, %s26
      %p39 = scmp.ge.s32.totalorder %s38, 1
      %s40 = scalar_select %p39, 0, %s38
      %s41 = sadd.s32 1, %s25
      %s42 = scalar_select %p39, %s41, %s25
      %p43 = scmp.ge.s32.totalorder %s42, 1
      %s44 = scalar_select %p43, 0, %s42
      %s45 = ssub.s32 %s25, %s44
      %s46 = ssub.s32 %s27, %s36
      %s47 = sor.u32 %s45, %s46
      %p48 = scmp.eq.s32.totalorder %s47, 0
      %s50 = sadd.s32 %s49, 1
      %s51 = scalar_select %p48, %s49, %s50
      %p54 = pneg %p48
      %p55 = scmp.eq.s32.totalorder %s18, 1
      %p56 = por %p54, %p55
      %p57 = scmp.ne.s32.totalorder %s49, %s52
      %p58 = scmp.eq.s32.totalorder %s18, 0
      %p59 = por %p57, %p58
      %p60 = scmp.ne.s32.totalorder %s49, %s52
      %p61 = scmp.eq.s32.totalorder %s23, 1
      %p62 = por %p60, %p61
      %p63 = scmp.ne.s32.totalorder %s52, %s53
      %p64 = scmp.eq.s32.totalorder %s23, 0
      %p65 = por %p63, %p64
      %p66 = scmp.ne.s32.totalorder %s52, %s53
      %p67 = scmp.eq.s32.totalorder %s24, 1
      %p68 = por %p66, %p67
      %p70 = scmp.ne.s32.totalorder %s53, %s69
      %p71 = scmp.eq.s32.totalorder %s24, 0
      %p72 = por %p70, %p71
      %s73 = ssub.s32 %s27, %s36
      %s74 = ssub.s32 %s26, %s40
      %s75 = sor.u32 %s73, %s74
      %p76 = scmp.eq.s32.totalorder %s75, 0
      %s78 = sadd.s32 %s77, 1
      %s79 = scalar_select %p76, %s77, %s78
      %p82 = pneg %p76
      %p83 = scmp.eq.s32.totalorder %s18, 1
      %p84 = por %p82, %p83
      %p85 = scmp.ne.s32.totalorder %s77, %s80
      %p86 = scmp.eq.s32.totalorder %s18, 0
      %p87 = por %p85, %p86
      %p88 = scmp.ne.s32.totalorder %s77, %s80
      %p89 = scmp.eq.s32.totalorder %s23, 1
      %p90 = por %p88, %p89
      %p91 = scmp.ne.s32.totalorder %s80, %s81
      %p92 = scmp.eq.s32.totalorder %s23, 0
      %p93 = por %p91, %p92
      %p94 = scmp.ne.s32.totalorder %s80, %s81
      %p95 = scmp.eq.s32.totalorder %s24, 1
      %p96 = por %p94, %p95
      %p98 = scmp.ne.s32.totalorder %s81, %s97
      %p99 = scmp.eq.s32.totalorder %s24, 0
      %p100 = por %p98, %p99
      %s101 = ssub.s32 %s26, %s40
      %p102 = scmp.eq.s32.totalorder %s101, 0
      %s104 = sadd.s32 %s103, 1
      %s105 = scalar_select %p102, %s103, %s104
      %p108 = pneg %p102
      %p109 = scmp.eq.s32.totalorder %s18, 1
      %p110 = por %p108, %p109
      %p111 = scmp.ne.s32.totalorder %s103, %s106
      %p112 = scmp.eq.s32.totalorder %s18, 0
      %p113 = por %p111, %p112
      %p114 = scmp.ne.s32.totalorder %s103, %s106
      %p115 = scmp.eq.s32.totalorder %s23, 1
      %p116 = por %p114, %p115
      %p117 = scmp.ne.s32.totalorder %s106, %s107
      %p118 = scmp.eq.s32.totalorder %s23, 0
      %p119 = por %p117, %p118
      %p120 = scmp.ne.s32.totalorder %s106, %s107
      %p121 = scmp.eq.s32.totalorder %s24, 1
      %p122 = por %p120, %p121
      %p124 = scmp.ne.s32.totalorder %s107, %s123
      %p125 = scmp.eq.s32.totalorder %s24, 0
      %p126 = por %p124, %p125
      %s127 = ssub.s32 %s25, %s44
      %s128 = ssub.s32 %s26, %s40
      %s129 = sor.u32 %s127, %s128
      %p130 = scmp.eq.s32.totalorder %s129, 0
      %s132 = sadd.s32 %s131, 1
      %s133 = scalar_select %p130, %s131, %s132
      %p136 = pneg %p130
      %p137 = scmp.eq.s32.totalorder %s18, 1
      %p138 = por %p136, %p137
      %p139 = scmp.ne.s32.totalorder %s131, %s134
      %p140 = scmp.eq.s32.totalorder %s18, 0
      %p141 = por %p139, %p140
      %p142 = scmp.ne.s32.totalorder %s131, %s134
      %p143 = scmp.eq.s32.totalorder %s23, 1
      %p144 = por %p142, %p143
      %p145 = scmp.ne.s32.totalorder %s134, %s135
      %p146 = scmp.eq.s32.totalorder %s23, 0
      %p147 = por %p145, %p146
      %p148 = scmp.ne.s32.totalorder %s134, %s135
      %p149 = scmp.eq.s32.totalorder %s24, 1
      %p150 = por %p148, %p149
      %p152 = scmp.ne.s32.totalorder %s135, %s151
      %p153 = scmp.eq.s32.totalorder %s24, 0
      %p154 = por %p152, %p153
      %p155 = scmp.le.s32.totalorder 1, %s18
      %p156 = scmp.lt.s32.totalorder %s18, 3
      %p157 = pnand %p155, %p156
      %p158 = pneg %p157
      // Predicated region
      $region9: #{tpu_custom_call.1} parent=5 // pred_check
        _
      $region10: #{tpu_custom_call.1} parent=5 // pred_check_branch
        %160 = sbr.rel (%p157) target = $region12
      $region11: #{tpu_custom_call.1} parent=5 // pred_region
        %s161 = ssub.s32 %s18, 1
        // Predicated region
        $region13: #{tpu_custom_call.1} parent=11 // pred_check
          %p162 = pneg %p119
        $region14: #{tpu_custom_call.1} parent=11 // pred_check_branch
          %164 = sbr.rel (%p162) target = $region16
        $region15: #{tpu_custom_call.1} parent=11 // pred_region
          %p165 = scmp.lt.s32.totalorder %s29, 0
          %s166 = scalar_select %p165, %s29, 0
          %s167 = scalar_lea.vmem %s3, %s166
        $region16: #{tpu_custom_call.1} parent=11 // pred_fallthru
          _
      $region12: #{tpu_custom_call.1} parent=5 // pred_fallthru
        _
      %p168 = scmp.lt.s32.totalorder %s18, 2
      // Predicated region
      $region17: #{tpu_custom_call.1} parent=5 // pred_check
        %p169 = pneg %p168
      $region18: #{tpu_custom_call.1} parent=5 // pred_check_branch
        %171 = sbr.rel (%p169) target = $region20
      $region19: #{tpu_custom_call.1} parent=5 // pred_region
        // Predicated region
        $region21: #{tpu_custom_call.1} parent=19 // pred_check
          %p172 = pneg %p59
        $region22: #{tpu_custom_call.1} parent=19 // pred_check_branch
          %174 = sbr.rel (%p172) target = $region24
        $region23: #{tpu_custom_call.1} parent=19 // pred_region
          %s175 = sand.u32 %s49, 1
          %s176 = scalar_lea.sflag [#allocation6], %s175
          %s177 = sand.u32 %s49, 1
          %s178 = smul.addr %s177, 512
          %s179 = scalar_lea.vmem [#allocation5], %s178
          %s180 = smul.u32 16, %s25
          %s181 = smul.u32 4, %s27
          %s183 = ssub.s32 8192, 8192
          %184 = vsyncadd %s176, %s183
          %s185 = smul.addr %s180, 8
          %s186 = sadd.s32 %s181, %s185
          %s187 = smul.addr %s186, 128
          %s188 = scalar_lea.hbm %s1, %s187
          %s189 = sshll.u32 %s179, 4
          %s190 = int_to_ptr.vmem [resolvable:$true] %s189
          %195 = dma.hbm_to_vmem [thread:$0]  %s188, 8192, %s190, %s176, 1024, 512, 32
        $region24: #{tpu_custom_call.1} parent=19 // pred_fallthru
          _
        // Predicated region
        $region25: #{tpu_custom_call.1} parent=19 // pred_check
          %p196 = pneg %p87
        $region26: #{tpu_custom_call.1} parent=19 // pred_check_branch
          %198 = sbr.rel (%p196) target = $region28
        $region27: #{tpu_custom_call.1} parent=19 // pred_region
          %s199 = sand.u32 %s77, 1
          %s200 = scalar_lea.sflag [#allocation9], %s199
          %s201 = sand.u32 %s77, 1
          %s202 = smul.addr %s201, 256
          %s203 = scalar_lea.vmem [#allocation8], %s202
          %s204 = smul.u32 64, %s27
          %s206 = ssub.s32 4096, 4096
          %207 = vsyncadd %s200, %s206
          %s208 = sadd.s32 %s26, %s204
          %s209 = smul.addr %s208, 64
          %s210 = scalar_lea.hbm %s2, %s209
          %s211 = sshll.u32 %s203, 4
          %s212 = int_to_ptr.vmem [resolvable:$true] %s211
          %217 = dma.hbm_to_vmem [thread:$0]  %s210, 4096, %s212, %s200, 64, 64, 4
        $region28: #{tpu_custom_call.1} parent=19 // pred_fallthru
          _
      $region20: #{tpu_custom_call.1} parent=5 // pred_fallthru
        _
      %p218 = scmp.le.s32.totalorder 1, %s18
      %p219 = scmp.lt.s32.totalorder %s18, 3
      %p220 = pnand %p218, %p219
      %p221 = pneg %p220
      // Predicated region
      $region29: #{tpu_custom_call.1} parent=5 // pred_check
        _
      $region30: #{tpu_custom_call.1} parent=5 // pred_check_branch
        %223 = sbr.rel (%p220) target = $region32
      $region31: #{tpu_custom_call.1} parent=5 // pred_region
        %s224 = ssub.s32 %s18, 1
        %s225 = sand.u32 %s52, 1
        %s226 = scalar_lea.sflag [#allocation6], %s225
        %s227 = sand.u32 %s52, 1
        %s228 = smul.addr %s227, 512
        %s229 = scalar_lea.vmem [#allocation5], %s228
        // Predicated region
        $region33: #{tpu_custom_call.1} parent=31 // pred_check
          %p230 = pneg %p65
        $region34: #{tpu_custom_call.1} parent=31 // pred_check_branch
          %232 = sbr.rel (%p230) target = $region36
        $region35: #{tpu_custom_call.1} parent=31 // pred_region
          %233 = dma.done %s226, 8192
        $region36: #{tpu_custom_call.1} parent=31 // pred_fallthru
          _
        %s234 = sand.u32 %s80, 1
        %s235 = scalar_lea.sflag [#allocation9], %s234
        %s236 = sand.u32 %s80, 1
        %s237 = smul.addr %s236, 256
        %s238 = scalar_lea.vmem [#allocation8], %s237
        // Predicated region
        $region37: #{tpu_custom_call.1} parent=31 // pred_check
          %p239 = pneg %p93
        $region38: #{tpu_custom_call.1} parent=31 // pred_check_branch
          %241 = sbr.rel (%p239) target = $region40
        $region39: #{tpu_custom_call.1} parent=31 // pred_region
          %242 = dma.done %s235, 4096
        $region40: #{tpu_custom_call.1} parent=31 // pred_fallthru
          _
        %s243 = sand.u32 %s52, 1
        %s244 = scalar_lea.sflag [#allocation6], %s243
        %s245 = sand.u32 %s52, 1
        %s246 = smul.addr %s245, 512
        %s247 = scalar_lea.vmem [#allocation5], %s246
        %p248 = pneg %p65
        %p249 = pneg %p62
        %s250 = sand.u32 %s80, 1
        %s251 = scalar_lea.sflag [#allocation9], %s250
        %s252 = sand.u32 %s80, 1
        %s253 = smul.addr %s252, 256
        %s254 = scalar_lea.vmem [#allocation8], %s253
        %p255 = pneg %p93
        %p256 = pneg %p90
        %p257 = scmp.lt.s32.totalorder %s29, 0
        %s258 = scalar_select %p257, %s29, 0
        %s259 = scalar_lea.vmem %s3, %s258
        %p260 = pneg %p119
        %p261 = pneg %p116
        %p262 = pneg %p147
        %p263 = pneg %p144
        %s264 = smul.u32 16, %s28
        %s265 = smul.u32 4, %s30
        %s266 = smul.u32 64, %s30
        %p267 = scmp.lt.s32.totalorder %s29, 0
        %s268 = scalar_select %p267, %s29, 0
        %s269 = scalar_lea.vmem %s3, %s268
        %s270 = smul.u32 16, %s28
        %p271 = scmp.eq.s32.totalorder %s30, 0
        // Predicated region
        $region41: #{tpu_custom_call.1} parent=31 // pred_check
          %p272 = pneg %p271
        $region42: #{tpu_custom_call.1} parent=31 // pred_check_branch
          %274 = sbr.rel (%p272) target = $region44
        $region43: #{tpu_custom_call.1} parent=31 // pred_region
          %275 = vst [vmem:[#allocation2] sm:$0xff] 0.0
          %276 = vst [vmem:[#allocation2 + $0x8] sm:$0xff] 0.0
          %277 = vst [vmem:[#allocation2 + $0x10] sm:$0xff] 0.0
          %278 = vst [vmem:[#allocation2 + $0x18] sm:$0xff] 0.0
          %279 = vst [vmem:[#allocation2 + $0x20] sm:$0xff] 0.0
          %280 = vst [vmem:[#allocation2 + $0x28] sm:$0xff] 0.0
          %281 = vst [vmem:[#allocation2 + $0x30] sm:$0xff] 0.0
          %282 = vst [vmem:[#allocation2 + $0x38] sm:$0xff] 0.0
          %283 = vst [vmem:[#allocation2 + $0x40] sm:$0xff] 0.0
          %284 = vst [vmem:[#allocation2 + $0x48] sm:$0xff] 0.0
          %285 = vst [vmem:[#allocation2 + $0x50] sm:$0xff] 0.0
          %286 = vst [vmem:[#allocation2 + $0x58] sm:$0xff] 0.0
          %287 = vst [vmem:[#allocation2 + $0x60] sm:$0xff] 0.0
          %288 = vst [vmem:[#allocation2 + $0x68] sm:$0xff] 0.0
          %289 = vst [vmem:[#allocation2 + $0x70] sm:$0xff] 0.0
          %290 = vst [vmem:[#allocation2 + $0x78] sm:$0xff] 0.0
        $region44: #{tpu_custom_call.1} parent=31 // pred_fallthru
          _
        %v291 = vld [vmem:[#allocation2] sm:$0xff]
        %v292 = vld [vmem:[#allocation2 + $0x8] sm:$0xff]
        %v293 = vld [vmem:[#allocation2 + $0x10] sm:$0xff]
        %v294 = vld [vmem:[#allocation2 + $0x18] sm:$0xff]
        %v295 = vld [vmem:[#allocation2 + $0x20] sm:$0xff]
        %v296 = vld [vmem:[#allocation2 + $0x28] sm:$0xff]
        %v297 = vld [vmem:[#allocation2 + $0x30] sm:$0xff]
        %v298 = vld [vmem:[#allocation2 + $0x38] sm:$0xff]
        %v299 = vld [vmem:[#allocation2 + $0x40] sm:$0xff]
        %v300 = vld [vmem:[#allocation2 + $0x48] sm:$0xff]
        %v301 = vld [vmem:[#allocation2 + $0x50] sm:$0xff]
        %v302 = vld [vmem:[#allocation2 + $0x58] sm:$0xff]
        %v303 = vld [vmem:[#allocation2 + $0x60] sm:$0xff]
        %v304 = vld [vmem:[#allocation2 + $0x68] sm:$0xff]
        %v305 = vld [vmem:[#allocation2 + $0x70] sm:$0xff]
        %v306 = vld [vmem:[#allocation2 + $0x78] sm:$0xff]
        %v307 = vld [vmem:[%s229] sm:$0xff]
        %v308 = vld [vmem:[%s229 + $0x8] sm:$0xff]
        %v309 = vld [vmem:[%s229 + $0x10] sm:$0xff]
        %v310 = vld [vmem:[%s229 + $0x18] sm:$0xff]
        %v311 = vld [vmem:[%s229 + $0x20] sm:$0xff]
        %v312 = vld [vmem:[%s229 + $0x28] sm:$0xff]
        %v313 = vld [vmem:[%s229 + $0x30] sm:$0xff]
        %v314 = vld [vmem:[%s229 + $0x38] sm:$0xff]
        %v315 = vld [vmem:[%s229 + $0x40] sm:$0xff]
        %v316 = vld [vmem:[%s229 + $0x48] sm:$0xff]
        %v317 = vld [vmem:[%s229 + $0x50] sm:$0xff]
        %v318 = vld [vmem:[%s229 + $0x58] sm:$0xff]
        %v319 = vld [vmem:[%s229 + $0x60] sm:$0xff]
        %v320 = vld [vmem:[%s229 + $0x68] sm:$0xff]
        %v321 = vld [vmem:[%s229 + $0x70] sm:$0xff]
        %v322 = vld [vmem:[%s229 + $0x78] sm:$0xff]
        %v323 = vld [vmem:[%s229 + $0x80] sm:$0xff]
        %v324 = vld [vmem:[%s229 + $0x88] sm:$0xff]
        %v325 = vld [vmem:[%s229 + $0x90] sm:$0xff]
        %v326 = vld [vmem:[%s229 + $0x98] sm:$0xff]
        %v327 = vld [vmem:[%s229 + $0xa0] sm:$0xff]
        %v328 = vld [vmem:[%s229 + $0xa8] sm:$0xff]
        %v329 = vld [vmem:[%s229 + $0xb0] sm:$0xff]
        %v330 = vld [vmem:[%s229 + $0xb8] sm:$0xff]
        %v331 = vld [vmem:[%s229 + $0xc0] sm:$0xff]
        %v332 = vld [vmem:[%s229 + $0xc8] sm:$0xff]
        %v333 = vld [vmem:[%s229 + $0xd0] sm:$0xff]
        %v334 = vld [vmem:[%s229 + $0xd8] sm:$0xff]
        %v335 = vld [vmem:[%s229 + $0xe0] sm:$0xff]
        %v336 = vld [vmem:[%s229 + $0xe8] sm:$0xff]
        %v337 = vld [vmem:[%s229 + $0xf0] sm:$0xff]
        %v338 = vld [vmem:[%s229 + $0xf8] sm:$0xff]
        %v339 = vld [vmem:[%s229 + $0x100] sm:$0xff]
        %v340 = vld [vmem:[%s229 + $0x108] sm:$0xff]
        %v341 = vld [vmem:[%s229 + $0x110] sm:$0xff]
        %v342 = vld [vmem:[%s229 + $0x118] sm:$0xff]
        %v343 = vld [vmem:[%s229 + $0x120] sm:$0xff]
        %v344 = vld [vmem:[%s229 + $0x128] sm:$0xff]
        %v345 = vld [vmem:[%s229 + $0x130] sm:$0xff]
        %v346 = vld [vmem:[%s229 + $0x138] sm:$0xff]
        %v347 = vld [vmem:[%s229 + $0x140] sm:$0xff]
        %v348 = vld [vmem:[%s229 + $0x148] sm:$0xff]
        %v349 = vld [vmem:[%s229 + $0x150] sm:$0xff]
        %v350 = vld [vmem:[%s229 + $0x158] sm:$0xff]
        %v351 = vld [vmem:[%s229 + $0x160] sm:$0xff]
        %v352 = vld [vmem:[%s229 + $0x168] sm:$0xff]
        %v353 = vld [vmem:[%s229 + $0x170] sm:$0xff]
        %v354 = vld [vmem:[%s229 + $0x178] sm:$0xff]
        %v355 = vld [vmem:[%s229 + $0x180] sm:$0xff]
        %v356 = vld [vmem:[%s229 + $0x188] sm:$0xff]
        %v357 = vld [vmem:[%s229 + $0x190] sm:$0xff]
        %v358 = vld [vmem:[%s229 + $0x198] sm:$0xff]
        %v359 = vld [vmem:[%s229 + $0x1a0] sm:$0xff]
        %v360 = vld [vmem:[%s229 + $0x1a8] sm:$0xff]
        %v361 = vld [vmem:[%s229 + $0x1b0] sm:$0xff]
        %v362 = vld [vmem:[%s229 + $0x1b8] sm:$0xff]
        %v363 = vld [vmem:[%s229 + $0x1c0] sm:$0xff]
        %v364 = vld [vmem:[%s229 + $0x1c8] sm:$0xff]
        %v365 = vld [vmem:[%s229 + $0x1d0] sm:$0xff]
        %v366 = vld [vmem:[%s229 + $0x1d8] sm:$0xff]
        %v367 = vld [vmem:[%s229 + $0x1e0] sm:$0xff]
        %v368 = vld [vmem:[%s229 + $0x1e8] sm:$0xff]
        %v369 = vld [vmem:[%s229 + $0x1f0] sm:$0xff]
        %v370 = vld [vmem:[%s229 + $0x1f8] sm:$0xff]
        %v371 = vld [vmem:[%s238] sm:$0xf]
        %v372 = vld [vmem:[%s238 + $0x4] sm:$0xf]
        %v373 = vld [vmem:[%s238 + $0x8] sm:$0xf]
        %v374 = vld [vmem:[%s238 + $0xc] sm:$0xf]
        %v375 = vld [vmem:[%s238 + $0x10] sm:$0xf]
        %v376 = vld [vmem:[%s238 + $0x14] sm:$0xf]
        %v377 = vld [vmem:[%s238 + $0x18] sm:$0xf]
        %v378 = vld [vmem:[%s238 + $0x1c] sm:$0xf]
        %v379 = vld [vmem:[%s238 + $0x20] sm:$0xf]
        %v380 = vld [vmem:[%s238 + $0x24] sm:$0xf]
        %v381 = vld [vmem:[%s238 + $0x28] sm:$0xf]
        %v382 = vld [vmem:[%s238 + $0x2c] sm:$0xf]
        %v383 = vld [vmem:[%s238 + $0x30] sm:$0xf]
        %v384 = vld [vmem:[%s238 + $0x34] sm:$0xf]
        %v385 = vld [vmem:[%s238 + $0x38] sm:$0xf]
        %v386 = vld [vmem:[%s238 + $0x3c] sm:$0xf]
        %v387 = vld [vmem:[%s238 + $0x40] sm:$0xf]
        %v388 = vld [vmem:[%s238 + $0x44] sm:$0xf]
        %v389 = vld [vmem:[%s238 + $0x48] sm:$0xf]
        %v390 = vld [vmem:[%s238 + $0x4c] sm:$0xf]
        %v391 = vld [vmem:[%s238 + $0x50] sm:$0xf]
        %v392 = vld [vmem:[%s238 + $0x54] sm:$0xf]
        %v393 = vld [vmem:[%s238 + $0x58] sm:$0xf]
        %v394 = vld [vmem:[%s238 + $0x5c] sm:$0xf]
        %v395 = vld [vmem:[%s238 + $0x60] sm:$0xf]
        %v396 = vld [vmem:[%s238 + $0x64] sm:$0xf]
        %v397 = vld [vmem:[%s238 + $0x68] sm:$0xf]
        %v398 = vld [vmem:[%s238 + $0x6c] sm:$0xf]
        %v399 = vld [vmem:[%s238 + $0x70] sm:$0xf]
        %v400 = vld [vmem:[%s238 + $0x74] sm:$0xf]
        %v401 = vld [vmem:[%s238 + $0x78] sm:$0xf]
        %v402 = vld [vmem:[%s238 + $0x7c] sm:$0xf]
        %v403 = vld [vmem:[%s238 + $0x80] sm:$0xf]
        %v404 = vld [vmem:[%s238 + $0x84] sm:$0xf]
        %v405 = vld [vmem:[%s238 + $0x88] sm:$0xf]
        %v406 = vld [vmem:[%s238 + $0x8c] sm:$0xf]
        %v407 = vld [vmem:[%s238 + $0x90] sm:$0xf]
        %v408 = vld [vmem:[%s238 + $0x94] sm:$0xf]
        %v409 = vld [vmem:[%s238 + $0x98] sm:$0xf]
        %v410 = vld [vmem:[%s238 + $0x9c] sm:$0xf]
        %v411 = vld [vmem:[%s238 + $0xa0] sm:$0xf]
        %v412 = vld [vmem:[%s238 + $0xa4] sm:$0xf]
        %v413 = vld [vmem:[%s238 + $0xa8] sm:$0xf]
        %v414 = vld [vmem:[%s238 + $0xac] sm:$0xf]
        %v415 = vld [vmem:[%s238 + $0xb0] sm:$0xf]
        %v416 = vld [vmem:[%s238 + $0xb4] sm:$0xf]
        %v417 = vld [vmem:[%s238 + $0xb8] sm:$0xf]
        %v418 = vld [vmem:[%s238 + $0xbc] sm:$0xf]
        %v419 = vld [vmem:[%s238 + $0xc0] sm:$0xf]
        %v420 = vld [vmem:[%s238 + $0xc4] sm:$0xf]
        %v421 = vld [vmem:[%s238 + $0xc8] sm:$0xf]
        %v422 = vld [vmem:[%s238 + $0xcc] sm:$0xf]
        %v423 = vld [vmem:[%s238 + $0xd0] sm:$0xf]
        %v424 = vld [vmem:[%s238 + $0xd4] sm:$0xf]
        %v425 = vld [vmem:[%s238 + $0xd8] sm:$0xf]
        %v426 = vld [vmem:[%s238 + $0xdc] sm:$0xf]
        %v427 = vld [vmem:[%s238 + $0xe0] sm:$0xf]
        %v428 = vld [vmem:[%s238 + $0xe4] sm:$0xf]
        %v429 = vld [vmem:[%s238 + $0xe8] sm:$0xf]
        %v430 = vld [vmem:[%s238 + $0xec] sm:$0xf]
        %v431 = vld [vmem:[%s238 + $0xf0] sm:$0xf]
        %v432 = vld [vmem:[%s238 + $0xf4] sm:$0xf]
        %v433 = vld [vmem:[%s238 + $0xf8] sm:$0xf]
        %v434 = vld [vmem:[%s238 + $0xfc] sm:$0xf]
        %v435 = vunpack.c.l.bf16 %v371
        %v436 = vunpack.c.l.bf16 %v372
        %v437 = vunpack.c.l.bf16 %v373
        %v438 = vunpack.c.l.bf16 %v374
        %v439 = vunpack.c.l.bf16 %v375
        %v440 = vunpack.c.l.bf16 %v376
        %v441 = vunpack.c.l.bf16 %v377
        %v442 = vunpack.c.l.bf16 %v378
        %v443 = vunpack.c.l.bf16 %v379
        %v444 = vunpack.c.l.bf16 %v380
        %v445 = vunpack.c.l.bf16 %v381
        %v446 = vunpack.c.l.bf16 %v382
        %v447 = vunpack.c.l.bf16 %v383
        %v448 = vunpack.c.l.bf16 %v384
        %v449 = vunpack.c.l.bf16 %v385
        %v450 = vunpack.c.l.bf16 %v386
        %v451 = vunpack.c.l.bf16 %v387
        %v452 = vunpack.c.l.bf16 %v388
        %v453 = vunpack.c.l.bf16 %v389
        %v454 = vunpack.c.l.bf16 %v390
        %v455 = vunpack.c.l.bf16 %v391
        %v456 = vunpack.c.l.bf16 %v392
        %v457 = vunpack.c.l.bf16 %v393
        %v458 = vunpack.c.l.bf16 %v394
        %v459 = vunpack.c.l.bf16 %v395
        %v460 = vunpack.c.l.bf16 %v396
        %v461 = vunpack.c.l.bf16 %v397
        %v462 = vunpack.c.l.bf16 %v398
        %v463 = vunpack.c.l.bf16 %v399
        %v464 = vunpack.c.l.bf16 %v400
        %v465 = vunpack.c.l.bf16 %v401
        %v466 = vunpack.c.l.bf16 %v402
        %v467 = vunpack.c.l.bf16 %v403
        %v468 = vunpack.c.l.bf16 %v404
        %v469 = vunpack.c.l.bf16 %v405
        %v470 = vunpack.c.l.bf16 %v406
        %v471 = vunpack.c.l.bf16 %v407
        %v472 = vunpack.c.l.bf16 %v408
        %v473 = vunpack.c.l.bf16 %v409
        %v474 = vunpack.c.l.bf16 %v410
        %v475 = vunpack.c.l.bf16 %v411
        %v476 = vunpack.c.l.bf16 %v412
        %v477 = vunpack.c.l.bf16 %v413
        %v478 = vunpack.c.l.bf16 %v414
        %v479 = vunpack.c.l.bf16 %v415
        %v480 = vunpack.c.l.bf16 %v416
        %v481 = vunpack.c.l.bf16 %v417
        %v482 = vunpack.c.l.bf16 %v418
        %v483 = vunpack.c.l.bf16 %v419
        %v484 = vunpack.c.l.bf16 %v420
        %v485 = vunpack.c.l.bf16 %v421
        %v486 = vunpack.c.l.bf16 %v422
        %v487 = vunpack.c.l.bf16 %v423
        %v488 = vunpack.c.l.bf16 %v424
        %v489 = vunpack.c.l.bf16 %v425
        %v490 = vunpack.c.l.bf16 %v426
        %v491 = vunpack.c.l.bf16 %v427
        %v492 = vunpack.c.l.bf16 %v428
        %v493 = vunpack.c.l.bf16 %v429
        %v494 = vunpack.c.l.bf16 %v430
        %v495 = vunpack.c.l.bf16 %v431
        %v496 = vunpack.c.l.bf16 %v432
        %v497 = vunpack.c.l.bf16 %v433
        %v498 = vunpack.c.l.bf16 %v434
        %499 = vmatprep.subr.mxu0 0.0
        %500 = vmatpush1.msra.mxu0 %v435
        %501 = vmatprep.subr.mxu0 0.0
        %502 = vmatpush1.msra.mxu0 %v436
        %503 = vmatprep.subr.mxu0 0.0
        %504 = vmatpush1.msra.mxu0 %v437
        %505 = vmatprep.subr.mxu0 0.0
        %506 = vmatpush1.msra.mxu0 %v438
        %507 = vmatprep.subr.mxu0 0.0
        %508 = vmatpush1.msra.mxu0 %v439
        %509 = vmatprep.subr.mxu0 0.0
        %510 = vmatpush1.msra.mxu0 %v440
        %511 = vmatprep.subr.mxu0 0.0
        %512 = vmatpush1.msra.mxu0 %v441
        %513 = vmatprep.subr.mxu0 0.0
        %514 = vmatpush1.msra.mxu0 %v442
        %515 = vmatprep.subr.mxu0 0.0
        %516 = vmatpush1.msra.mxu0 %v443
        %517 = vmatprep.subr.mxu0 0.0
        %518 = vmatpush1.msra.mxu0 %v444
        %519 = vmatprep.subr.mxu0 0.0
        %520 = vmatpush1.msra.mxu0 %v445
        %521 = vmatprep.subr.mxu0 0.0
        %522 = vmatpush1.msra.mxu0 %v446
        %523 = vmatprep.subr.mxu0 0.0
        %524 = vmatpush1.msra.mxu0 %v447
        %525 = vmatprep.subr.mxu0 0.0
        %526 = vmatpush1.msra.mxu0 %v448
        %527 = vmatprep.subr.mxu0 0.0
        %528 = vmatpush1.msra.mxu0 %v449
        %529 = vmatprep.subr.mxu0 0.0
        %530 = vmatpush1.msra.mxu0 %v450
        %531 = vmatprep.subr.mxu0 0.0
        %532 = vmatpush1.msra.mxu0 %v451
        %533 = vmatprep.subr.mxu0 0.0
        %534 = vmatpush1.msra.mxu0 %v452
        %535 = vmatprep.subr.mxu0 0.0
        %536 = vmatpush1.msra.mxu0 %v453
        %537 = vmatprep.subr.mxu0 0.0
        %538 = vmatpush1.msra.mxu0 %v454
        %539 = vmatprep.subr.mxu0 0.0
        %540 = vmatpush1.msra.mxu0 %v455
        %541 = vmatprep.subr.mxu0 0.0
        %542 = vmatpush1.msra.mxu0 %v456
        %543 = vmatprep.subr.mxu0 0.0
        %544 = vmatpush1.msra.mxu0 %v457
        %545 = vmatprep.subr.mxu0 0.0
        %546 = vmatpush1.msra.mxu0 %v458
        %547 = vmatprep.subr.mxu0 0.0
        %548 = vmatpush1.msra.mxu0 %v459
        %549 = vmatprep.subr.mxu0 0.0
        %550 = vmatpush1.msra.mxu0 %v460
        %551 = vmatprep.subr.mxu0 0.0
        %552 = vmatpush1.msra.mxu0 %v461
        %553 = vmatprep.subr.mxu0 0.0
        %554 = vmatpush1.msra.mxu0 %v462
        %555 = vmatprep.subr.mxu0 0.0
        %556 = vmatpush1.msra.mxu0 %v463
        %557 = vmatprep.subr.mxu0 0.0
        %558 = vmatpush1.msra.mxu0 %v464
        %559 = vmatprep.subr.mxu0 0.0
        %560 = vmatpush1.msra.mxu0 %v465
        %561 = vmatprep.subr.mxu0 0.0
        %562 = vmatpush1.msra.mxu0 %v466
        %563 = vmatprep.mubr.f32.mxu0 %v308
        %564 = vmatmul.mubr.f32.gmra.mrb[0].mxu0 %v307
        %v565 = vpop.f32.mrb[0].mxu0
        %v566 = vadd.f32 0.0, %v565
        %v567 = vpop.f32.mrb[0].mxu0
        %568 = vmatprep.mubr.f32.mxu0 %v312
        %569 = vmatmul.mubr.f32.gmra.mrb[0].mxu0 %v311
        %v570 = vpop.f32.mrb[0].mxu0
        %v571 = vadd.f32 0.0, %v570
        %v572 = vpop.f32.mrb[0].mxu0
        %573 = vmatprep.mubr.f32.mxu0 %v316
        %574 = vmatmul.mubr.f32.gmra.mrb[0].mxu0 %v315
        %v575 = vpop.f32.mrb[0].mxu0
        %v576 = vadd.f32 0.0, %v575
        %v577 = vpop.f32.mrb[0].mxu0
        %578 = vmatprep.mubr.f32.mxu0 %v320
        %579 = vmatmul.mubr.f32.gmra.mrb[0].mxu0 %v319
        %v580 = vpop.f32.mrb[0].mxu0
        %v581 = vadd.f32 0.0, %v580
        %v582 = vpop.f32.mrb[0].mxu0
        %583 = vmatprep.mubr.f32.mxu0 %v324
        %584 = vmatmul.mubr.f32.gmra.mrb[0].mxu0 %v323
        %v585 = vpop.f32.mrb[0].mxu0
        %v586 = vadd.f32 0.0, %v585
        %v587 = vpop.f32.mrb[0].mxu0
        %588 = vmatprep.mubr.f32.mxu0 %v328
        %589 = vmatmul.mubr.f32.gmra.mrb[0].mxu0 %v327
        %v590 = vpop.f32.mrb[0].mxu0
        %v591 = vadd.f32 0.0, %v590
        %v592 = vpop.f32.mrb[0].mxu0
        %593 = vmatprep.mubr.f32.mxu0 %v332
        %594 = vmatmul.mubr.f32.gmra.mrb[0].mxu0 %v331
        %v595 = vpop.f32.mrb[0].mxu0
        %v596 = vadd.f32 0.0, %v595
        %v597 = vpop.f32.mrb[0].mxu0
        %598 = vmatprep.mubr.f32.mxu0 %v336
        %599 = vmatmul.mubr.f32.gmra.mrb[0].mxu0 %v335
        %v600 = vpop.f32.mrb[0].mxu0
        %v601 = vadd.f32 0.0, %v600
        %v602 = vpop.f32.mrb[0].mxu0
        %603 = vmatprep.mubr.f32.mxu0 %v340
        %604 = vmatmul.mubr.f32.gmra.mrb[0].mxu0 %v339
        %v605 = vpop.f32.mrb[0].mxu0
        %v606 = vadd.f32 0.0, %v605
        %v607 = vpop.f32.mrb[0].mxu0
        %608 = vmatprep.mubr.f32.mxu0 %v344
        %609 = vmatmul.mubr.f32.gmra.mrb[0].mxu0 %v343
        %v610 = vpop.f32.mrb[0].mxu0
        %v611 = vadd.f32 0.0, %v610
        %v612 = vpop.f32.mrb[0].mxu0
        %613 = vmatprep.mubr.f32.mxu0 %v348
        %614 = vmatmul.mubr.f32.gmra.mrb[0].mxu0 %v347
        %v615 = vpop.f32.mrb[0].mxu0
        %v616 = vadd.f32 0.0, %v615
        %v617 = vpop.f32.mrb[0].mxu0
        %618 = vmatprep.mubr.f32.mxu0 %v352
        %619 = vmatmul.mubr.f32.gmra.mrb[0].mxu0 %v351
        %v620 = vpop.f32.mrb[0].mxu0
        %v621 = vadd.f32 0.0, %v620
        %v622 = vpop.f32.mrb[0].mxu0
        %623 = vmatprep.mubr.f32.mxu0 %v356
        %624 = vmatmul.mubr.f32.gmra.mrb[0].mxu0 %v355
        %v625 = vpop.f32.mrb[0].mxu0
        %v626 = vadd.f32 0.0, %v625
        %v627 = vpop.f32.mrb[0].mxu0
        %628 = vmatprep.mubr.f32.mxu0 %v360
        %629 = vmatmul.mubr.f32.gmra.mrb[0].mxu0 %v359
        %v630 = vpop.f32.mrb[0].mxu0
        %v631 = vadd.f32 0.0, %v630
        %v632 = vpop.f32.mrb[0].mxu0
        %633 = vmatprep.mubr.f32.mxu0 %v364
        %634 = vmatmul.mubr.f32.gmra.mrb[0].mxu0 %v363
        %v635 = vpop.f32.mrb[0].mxu0
        %v636 = vadd.f32 0.0, %v635
        %v637 = vpop.f32.mrb[0].mxu0
        %638 = vmatprep.mubr.f32.mxu0 %v368
        %639 = vmatmul.mubr.f32.gmra.mrb[0].mxu0 %v367
        %v640 = vpop.f32.mrb[0].mxu0
        %v641 = vadd.f32 0.0, %v640
        %v642 = vpop.f32.mrb[0].mxu0
        %643 = vdwg.mxu0
        %644 = vmatprep.subr.mxu0 0.0
        %645 = vmatpush1.msra.mxu0 %v467
        %646 = vmatprep.subr.mxu0 0.0
        %647 = vmatpush1.msra.mxu0 %v468
        %648 = vmatprep.subr.mxu0 0.0
        %649 = vmatpush1.msra.mxu0 %v469
        %650 = vmatprep.subr.mxu0 0.0
        %651 = vmatpush1.msra.mxu0 %v470
        %652 = vmatprep.subr.mxu0 0.0
        %653 = vmatpush1.msra.mxu0 %v471
        %654 = vmatprep.subr.mxu0 0.0
        %655 = vmatpush1.msra.mxu0 %v472
        %656 = vmatprep.subr.mxu0 0.0
        %657 = vmatpush1.msra.mxu0 %v473
        %658 = vmatprep.subr.mxu0 0.0
        %659 = vmatpush1.msra.mxu0 %v474
        %660 = vmatprep.subr.mxu0 0.0
        %661 = vmatpush1.msra.mxu0 %v475
        %662 = vmatprep.subr.mxu0 0.0
        %663 = vmatpush1.msra.mxu0 %v476
        %664 = vmatprep.subr.mxu0 0.0
        %665 = vmatpush1.msra.mxu0 %v477
        %666 = vmatprep.subr.mxu0 0.0
        %667 = vmatpush1.msra.mxu0 %v478
        %668 = vmatprep.subr.mxu0 0.0
        %669 = vmatpush1.msra.mxu0 %v479
        %670 = vmatprep.subr.mxu0 0.0
        %671 = vmatpush1.msra.mxu0 %v480
        %672 = vmatprep.subr.mxu0 0.0
        %673 = vmatpush1.msra.mxu0 %v481
        %674 = vmatprep.subr.mxu0 0.0
        %675 = vmatpush1.msra.mxu0 %v482
        %676 = vmatprep.subr.mxu0 0.0
        %677 = vmatpush1.msra.mxu0 %v483
        %678 = vmatprep.subr.mxu0 0.0
        %679 = vmatpush1.msra.mxu0 %v484
        %680 = vmatprep.subr.mxu0 0.0
        %681 = vmatpush1.msra.mxu0 %v485
        %682 = vmatprep.subr.mxu0 0.0
        %683 = vmatpush1.msra.mxu0 %v486
        %684 = vmatprep.subr.mxu0 0.0
        %685 = vmatpush1.msra.mxu0 %v487
        %686 = vmatprep.subr.mxu0 0.0
        %687 = vmatpush1.msra.mxu0 %v488
        %688 = vmatprep.subr.mxu0 0.0
        %689 = vmatpush1.msra.mxu0 %v489
        %690 = vmatprep.subr.mxu0 0.0
        %691 = vmatpush1.msra.mxu0 %v490
        %692 = vmatprep.subr.mxu0 0.0
        %693 = vmatpush1.msra.mxu0 %v491
        %694 = vmatprep.subr.mxu0 0.0
        %695 = vmatpush1.msra.mxu0 %v492
        %696 = vmatprep.subr.mxu0 0.0
        %697 = vmatpush1.msra.mxu0 %v493
        %698 = vmatprep.subr.mxu0 0.0
        %699 = vmatpush1.msra.mxu0 %v494
        %700 = vmatprep.subr.mxu0 0.0
        %701 = vmatpush1.msra.mxu0 %v495
        %702 = vmatprep.subr.mxu0 0.0
        %703 = vmatpush1.msra.mxu0 %v496
        %704 = vmatprep.subr.mxu0 0.0
        %705 = vmatpush1.msra.mxu0 %v497
        %706 = vmatprep.subr.mxu0 0.0
        %707 = vmatpush1.msra.mxu0 %v498
        %708 = vmatprep.mubr.f32.mxu0 %v310
        %709 = vmatmul.mubr.f32.gmra.mrb[0].mxu0 %v309
        %v710 = vpop.f32.mrb[0].mxu0
        %v711 = vadd.f32 %v566, %v710
        %v712 = vpop.f32.mrb[0].mxu0
        %713 = vmatprep.mubr.f32.mxu0 %v314
        %714 = vmatmul.mubr.f32.gmra.mrb[0].mxu0 %v313
        %v715 = vpop.f32.mrb[0].mxu0
        %v716 = vadd.f32 %v571, %v715
        %v717 = vpop.f32.mrb[0].mxu0
        %718 = vmatprep.mubr.f32.mxu0 %v318
        %719 = vmatmul.mubr.f32.gmra.mrb[0].mxu0 %v317
        %v720 = vpop.f32.mrb[0].mxu0
        %v721 = vadd.f32 %v576, %v720
        %v722 = vpop.f32.mrb[0].mxu0
        %723 = vmatprep.mubr.f32.mxu0 %v322
        %724 = vmatmul.mubr.f32.gmra.mrb[0].mxu0 %v321
        %v725 = vpop.f32.mrb[0].mxu0
        %v726 = vadd.f32 %v581, %v725
        %v727 = vpop.f32.mrb[0].mxu0
        %728 = vmatprep.mubr.f32.mxu0 %v326
        %729 = vmatmul.mubr.f32.gmra.mrb[0].mxu0 %v325
        %v730 = vpop.f32.mrb[0].mxu0
        %v731 = vadd.f32 %v586, %v730
        %v732 = vpop.f32.mrb[0].mxu0
        %733 = vmatprep.mubr.f32.mxu0 %v330
        %734 = vmatmul.mubr.f32.gmra.mrb[0].mxu0 %v329
        %v735 = vpop.f32.mrb[0].mxu0
        %v736 = vadd.f32 %v591, %v735
        %v737 = vpop.f32.mrb[0].mxu0
        %738 = vmatprep.mubr.f32.mxu0 %v334
        %739 = vmatmul.mubr.f32.gmra.mrb[0].mxu0 %v333
        %v740 = vpop.f32.mrb[0].mxu0
        %v741 = vadd.f32 %v596, %v740
        %v742 = vpop.f32.mrb[0].mxu0
        %743 = vmatprep.mubr.f32.mxu0 %v338
        %744 = vmatmul.mubr.f32.gmra.mrb[0].mxu0 %v337
        %v745 = vpop.f32.mrb[0].mxu0
        %v746 = vadd.f32 %v601, %v745
        %v747 = vpop.f32.mrb[0].mxu0
        %748 = vmatprep.mubr.f32.mxu0 %v342
        %749 = vmatmul.mubr.f32.gmra.mrb[0].mxu0 %v341
        %v750 = vpop.f32.mrb[0].mxu0
        %v751 = vadd.f32 %v606, %v750
        %v752 = vpop.f32.mrb[0].mxu0
        %753 = vmatprep.mubr.f32.mxu0 %v346
        %754 = vmatmul.mubr.f32.gmra.mrb[0].mxu0 %v345
        %v755 = vpop.f32.mrb[0].mxu0
        %v756 = vadd.f32 %v611, %v755
        %v757 = vpop.f32.mrb[0].mxu0
        %758 = vmatprep.mubr.f32.mxu0 %v350
        %759 = vmatmul.mubr.f32.gmra.mrb[0].mxu0 %v349
        %v760 = vpop.f32.mrb[0].mxu0
        %v761 = vadd.f32 %v616, %v760
        %v762 = vpop.f32.mrb[0].mxu0
        %763 = vmatprep.mubr.f32.mxu0 %v354
        %764 = vmatmul.mubr.f32.gmra.mrb[0].mxu0 %v353
        %v765 = vpop.f32.mrb[0].mxu0
        %v766 = vadd.f32 %v621, %v765
        %v767 = vpop.f32.mrb[0].mxu0
        %768 = vmatprep.mubr.f32.mxu0 %v358
        %769 = vmatmul.mubr.f32.gmra.mrb[0].mxu0 %v357
        %v770 = vpop.f32.mrb[0].mxu0
        %v771 = vadd.f32 %v626, %v770
        %v772 = vpop.f32.mrb[0].mxu0
        %773 = vmatprep.mubr.f32.mxu0 %v362
        %774 = vmatmul.mubr.f32.gmra.mrb[0].mxu0 %v361
        %v775 = vpop.f32.mrb[0].mxu0
        %v776 = vadd.f32 %v631, %v775
        %v777 = vpop.f32.mrb[0].mxu0
        %778 = vmatprep.mubr.f32.mxu0 %v366
        %779 = vmatmul.mubr.f32.gmra.mrb[0].mxu0 %v365
        %v780 = vpop.f32.mrb[0].mxu0
        %v781 = vadd.f32 %v636, %v780
        %v782 = vpop.f32.mrb[0].mxu0
        %783 = vmatprep.mubr.f32.mxu0 %v370
        %784 = vmatmul.mubr.f32.gmra.mrb[0].mxu0 %v369
        %v785 = vpop.f32.mrb[0].mxu0
        %v786 = vadd.f32 %v641, %v785
        %v787 = vpop.f32.mrb[0].mxu0
        %788 = vdwg.mxu0
        %v789 = vadd.f32 %v291, %v711
        %v790 = vadd.f32 %v292, %v716
        %v791 = vadd.f32 %v293, %v721
        %v792 = vadd.f32 %v294, %v726
        %v793 = vadd.f32 %v295, %v731
        %v794 = vadd.f32 %v296, %v736
        %v795 = vadd.f32 %v297, %v741
        %v796 = vadd.f32 %v298, %v746
        %v797 = vadd.f32 %v299, %v751
        %v798 = vadd.f32 %v300, %v756
        %v799 = vadd.f32 %v301, %v761
        %v800 = vadd.f32 %v302, %v766
        %v801 = vadd.f32 %v303, %v771
        %v802 = vadd.f32 %v304, %v776
        %v803 = vadd.f32 %v305, %v781
        %v804 = vadd.f32 %v306, %v786
        %805 = vst [vmem:[#allocation2] sm:$0xff] %v789
        %806 = vst [vmem:[#allocation2 + $0x8] sm:$0xff] %v790
        %807 = vst [vmem:[#allocation2 + $0x10] sm:$0xff] %v791
        %808 = vst [vmem:[#allocation2 + $0x18] sm:$0xff] %v792
        %809 = vst [vmem:[#allocation2 + $0x20] sm:$0xff] %v793
        %810 = vst [vmem:[#allocation2 + $0x28] sm:$0xff] %v794
        %811 = vst [vmem:[#allocation2 + $0x30] sm:$0xff] %v795
        %812 = vst [vmem:[#allocation2 + $0x38] sm:$0xff] %v796
        %813 = vst [vmem:[#allocation2 + $0x40] sm:$0xff] %v797
        %814 = vst [vmem:[#allocation2 + $0x48] sm:$0xff] %v798
        %815 = vst [vmem:[#allocation2 + $0x50] sm:$0xff] %v799
        %816 = vst [vmem:[#allocation2 + $0x58] sm:$0xff] %v800
        %817 = vst [vmem:[#allocation2 + $0x60] sm:$0xff] %v801
        %818 = vst [vmem:[#allocation2 + $0x68] sm:$0xff] %v802
        %819 = vst [vmem:[#allocation2 + $0x70] sm:$0xff] %v803
        %820 = vst [vmem:[#allocation2 + $0x78] sm:$0xff] %v804
        %p821 = scmp.eq.s32.totalorder %s30, 1
        // Predicated region
        $region45: #{tpu_custom_call.1} parent=31 // pred_check
          %p822 = pneg %p821
        $region46: #{tpu_custom_call.1} parent=31 // pred_check_branch
          %824 = sbr.rel (%p822) target = $region48
        $region47: #{tpu_custom_call.1} parent=31 // pred_region
          %s825 = sld [smem:[#allocation4]]
          %v826 = vstv %s825
          %v827 = vrcp.pop %v826
          %s828 = vtos %v827
          %v829 = vld [vmem:[#allocation2] sm:$0xff]
          %v830 = vld [vmem:[#allocation2 + $0x8] sm:$0xff]
          %v831 = vld [vmem:[#allocation2 + $0x10] sm:$0xff]
          %v832 = vld [vmem:[#allocation2 + $0x18] sm:$0xff]
          %v833 = vld [vmem:[#allocation2 + $0x20] sm:$0xff]
          %v834 = vld [vmem:[#allocation2 + $0x28] sm:$0xff]
          %v835 = vld [vmem:[#allocation2 + $0x30] sm:$0xff]
          %v836 = vld [vmem:[#allocation2 + $0x38] sm:$0xff]
          %v837 = vld [vmem:[#allocation2 + $0x40] sm:$0xff]
          %v838 = vld [vmem:[#allocation2 + $0x48] sm:$0xff]
          %v839 = vld [vmem:[#allocation2 + $0x50] sm:$0xff]
          %v840 = vld [vmem:[#allocation2 + $0x58] sm:$0xff]
          %v841 = vld [vmem:[#allocation2 + $0x60] sm:$0xff]
          %v842 = vld [vmem:[#allocation2 + $0x68] sm:$0xff]
          %v843 = vld [vmem:[#allocation2 + $0x70] sm:$0xff]
          %v844 = vld [vmem:[#allocation2 + $0x78] sm:$0xff]
          %v845 = vld [vmem:[%s269] sm:$0x1]
          %v847 = vlaneseq
          %v848 = vshrl.u32 %v847, 7
          %v849 = vsub.s32 0, %v848
          %v850 = vrot.slane %v845, %v849
          %v852 = vadd.f32 %v829, %v850
          %v853 = vadd.f32 %v830, %v850
          %v854 = vadd.f32 %v831, %v850
          %v855 = vadd.f32 %v832, %v850
          %v856 = vadd.f32 %v833, %v850
          %v857 = vadd.f32 %v834, %v850
          %v858 = vadd.f32 %v835, %v850
          %v859 = vadd.f32 %v836, %v850
          %v860 = vadd.f32 %v837, %v850
          %v861 = vadd.f32 %v838, %v850
          %v862 = vadd.f32 %v839, %v850
          %v863 = vadd.f32 %v840, %v850
          %v864 = vadd.f32 %v841, %v850
          %v865 = vadd.f32 %v842, %v850
          %v866 = vadd.f32 %v843, %v850
          %v867 = vadd.f32 %v844, %v850
          %v868 = vstv %s828
          %v869 = vmul.f32 %v852, %v868
          %v870 = vmul.f32 %v853, %v868
          %v871 = vmul.f32 %v854, %v868
          %v872 = vmul.f32 %v855, %v868
          %v873 = vmul.f32 %v856, %v868
          %v874 = vmul.f32 %v857, %v868
          %v875 = vmul.f32 %v858, %v868
          %v876 = vmul.f32 %v859, %v868
          %v877 = vmul.f32 %v860, %v868
          %v878 = vmul.f32 %v861, %v868
          %v879 = vmul.f32 %v862, %v868
          %v880 = vmul.f32 %v863, %v868
          %v881 = vmul.f32 %v864, %v868
          %v882 = vmul.f32 %v865, %v868
          %v883 = vmul.f32 %v866, %v868
          %v884 = vmul.f32 %v867, %v868
          %885 = vst [vmem:[#allocation10] sm:$0xff] %v869
          %886 = vst [vmem:[#allocation10 + $0x8] sm:$0xff] %v870
          %887 = vst [vmem:[#allocation10 + $0x10] sm:$0xff] %v871
          %888 = vst [vmem:[#allocation10 + $0x18] sm:$0xff] %v872
          %889 = vst [vmem:[#allocation10 + $0x20] sm:$0xff] %v873
          %890 = vst [vmem:[#allocation10 + $0x28] sm:$0xff] %v874
          %891 = vst [vmem:[#allocation10 + $0x30] sm:$0xff] %v875
          %892 = vst [vmem:[#allocation10 + $0x38] sm:$0xff] %v876
          %893 = vst [vmem:[#allocation10 + $0x40] sm:$0xff] %v877
          %894 = vst [vmem:[#allocation10 + $0x48] sm:$0xff] %v878
          %895 = vst [vmem:[#allocation10 + $0x50] sm:$0xff] %v879
          %896 = vst [vmem:[#allocation10 + $0x58] sm:$0xff] %v880
          %897 = vst [vmem:[#allocation10 + $0x60] sm:$0xff] %v881
          %898 = vst [vmem:[#allocation10 + $0x68] sm:$0xff] %v882
          %899 = vst [vmem:[#allocation10 + $0x70] sm:$0xff] %v883
          %900 = vst [vmem:[#allocation10 + $0x78] sm:$0xff] %v884
        $region48: #{tpu_custom_call.1} parent=31 // pred_fallthru
          _
        // Predicated region
        $region49: #{tpu_custom_call.1} parent=31 // pred_check
          %p901 = pneg %p144
        $region50: #{tpu_custom_call.1} parent=31 // pred_check_branch
          %903 = sbr.rel (%p901) target = $region52
        $region51: #{tpu_custom_call.1} parent=31 // pred_region
          %s904 = smul.u32 16, %s28
          %s906 = ssub.s32 2048, 2048
          %907 = vsyncadd [#allocation7], %s906
          %s908 = sadd.s32 %s29, %s904
          %s909 = smul.addr %s908, 128
          %s910 = scalar_lea.hbm %s4, %s909
          %s911 = sshll.u32 [#allocation10], 4
          %s912 = int_to_ptr.vmem [resolvable:$true] %s911
          %917 = dma.vmem_to_hbm [thread:$0]  %s912, 2048, %s910, [#allocation7], 128, 128, 8
        $region52: #{tpu_custom_call.1} parent=31 // pred_fallthru
          _
        // Predicated region
        $region53: #{tpu_custom_call.1} parent=31 // pred_check
          %p918 = pneg %p144
        $region54: #{tpu_custom_call.1} parent=31 // pred_check_branch
          %920 = sbr.rel (%p918) target = $region56
        $region55: #{tpu_custom_call.1} parent=31 // pred_region
          %921 = dma.done [#allocation7], 2048
        $region56: #{tpu_custom_call.1} parent=31 // pred_fallthru
          _
      $region32: #{tpu_custom_call.1} parent=5 // pred_fallthru
        _
      %p922 = scmp.le.s32.totalorder 2, %s18
      // Predicated region
      $region57: #{tpu_custom_call.1} parent=5 // pred_check
        %p923 = pneg %p922
      $region58: #{tpu_custom_call.1} parent=5 // pred_check_branch
        %925 = sbr.rel (%p923) target = $region60
      $region59: #{tpu_custom_call.1} parent=5 // pred_region
        %s926 = ssub.s32 %s18, 2
      $region60: #{tpu_custom_call.1} parent=5 // pred_fallthru
        _
    $region6: #{tpu_custom_call.1} parent=1 // loop_footer
      %s22 = sadd.s32 1, %s18
    $region7: #{tpu_custom_call.1} parent=1 // loop_footer_branch
      %17 = sbr.rel target = $region3
    $region8: #{tpu_custom_call.1} parent=1 // loop_exit
      _
    %927 = vsyncpa [#allocation6], 1
    %s928 = scalar_lea.sflag [#allocation6], 1
    %929 = vsyncpa %s928, 1
    %930 = vsyncpa [#allocation9], 1
    %s931 = scalar_lea.sflag [#allocation9], 1
    %932 = vsyncpa %s931, 1
    %933 = vsyncpa [#allocation7], 1
    %s934 = scalar_lea.sflag [#allocation7], 1
    %935 = vsyncpa %s934, 1

</llo_original>
